<compile_context>
chip_gen: v7x
topology: tpu7x:2x2x1
jax: 0.10.0
libtpu: 0.0.40
codegen_flags: <defaults>
</compile_context>

<pallas_src>
import jax
import jax.numpy as jnp
from jax.experimental import pallas as pl
from jax.experimental.pallas import tpu as pltpu


def _round_up(a, m):
    return ((a + m - 1) // m) * m


def _make_conv3x3_relu_kernel(cin, cout, wp, lout):
    """Kernel factory.  wp = W + 2 (padded row stride), lout = lane-dense output slab len."""
    taps = [(kh, kw) for kh in range(3) for kw in range(3)]
    use_mxu = cin >= 8   # tiny channel counts: pure-VPU broadcast FMAs (review suggestion)

    def kernel(x_ref, w_ref, b_ref, o_ref):
        # x_ref: (Cin, LIN)  flattened zero-padded frame (row stride wp)
        # w_ref: (9, Cout, Cin)   per-tap weight matrices (resident in VMEM)
        # b_ref: (Cout, 1)        bias column (resident)
        # o_ref: (Cout, LOUT)     flattened output slab: out[h, w] = slab[h*wp + w]
        acc = jnp.zeros((cout, lout), dtype=jnp.float32)
        for t, (kh, kw) in enumerate(taps):
            off = kh * wp + kw                      # static shift for this tap
            xs = x_ref[:, off:off + lout]           # (Cin, LOUT) shifted view of the frame
            if use_mxu:
                acc = acc + jnp.dot(w_ref[t], xs,
                                    preferred_element_type=jnp.float32)
            else:
                for ci in range(cin):               # VPU: (Cout,1) * (1,LOUT) broadcast FMA
                    acc = acc + w_ref[t, :, ci:ci + 1] * xs[ci:ci + 1, :]
        acc = acc + b_ref[...]                      # bias broadcast (Cout,1)->(Cout,LOUT)
        o_ref[...] = jnp.maximum(acc, 0.0).astype(o_ref.dtype)

    return kernel


def frame_wise_nn(x, weight, bias):
    """FrameWiseNN.forward: x (B, C, T, H, W) -> per-frame conv3x3+ReLU -> (B, Cout, T, H, W)."""
    x = x.astype(jnp.float32)
    B, C, T, H, W = x.shape
    Cout, Cin, KH, KW = weight.shape
    assert (Cin, KH, KW) == (C, 3, 3)

    Wp = W + 2                                   # zero-padded row stride
    LIN_REAL = (H + 2) * Wp                      # flattened zero-padded frame length
    LOUT = _round_up(H * Wp, 128)                # lane-dense output slab (multiple of 128)
    LIN = _round_up(LOUT + 2 * Wp + 2, 128)      # covers the largest shifted read

    # Layout plumbing (fused by XLA into ~one pass): halo pad + flatten.  No im2col blowup,
    # no padded-M copy.
    xf = jnp.pad(x.transpose(0, 2, 1, 3, 4),
                 ((0, 0), (0, 0), (0, 0), (1, 1), (1, 1)))            # (B, T, C, H+2, W+2)
    xf = xf.reshape(B, T, C, LIN_REAL)
    xf = jnp.pad(xf, ((0, 0), (0, 0), (0, 0), (0, LIN - LIN_REAL)))    # (B, T, C, LIN)

    w_taps = weight.astype(jnp.float32).transpose(2, 3, 0, 1).reshape(9, Cout, C)
    b_col = bias.astype(jnp.float32).reshape(Cout, 1)

    kernel = _make_conv3x3_relu_kernel(C, Cout, Wp, LOUT)

    # TODO(synk): for very large frames (where (Cin+Cout)*H*Wp*4B approaches VMEM, esp. the
    # 64 MiB v7x budget) add a third grid axis tiling the flat spatial axis with a 2*Wp+2 halo.
    out = pl.pallas_call(
        kernel,
        out_shape=jax.ShapeDtypeStruct((B, T, Cout, LOUT), jnp.float32),
        grid_spec=pltpu.PrefetchScalarGridSpec(
            num_scalar_prefetch=0,
            grid=(B, T),                                    # one whole frame per step
            in_specs=[
                pl.BlockSpec((None, None, C, LIN), lambda b, t: (b, t, 0, 0)),
                pl.BlockSpec((9, Cout, C), lambda b, t: (0, 0, 0)),   # weights resident
                pl.BlockSpec((Cout, 1), lambda b, t: (0, 0)),         # bias resident
            ],
            out_specs=pl.BlockSpec((None, None, Cout, LOUT),
                                   lambda b, t: (b, t, 0, 0)),
        ),
        compiler_params=pltpu.CompilerParams(
            dimension_semantics=("parallel", "parallel")),
    )(xf, w_taps, b_col)

    # Undo the flat layout (one fused slice + transpose pass over the output only).
    y = out[..., :H * Wp].reshape(B, T, Cout, H, Wp)[..., :W]
    return y.transpose(0, 2, 1, 3, 4)                       # (B, Cout, T, H, W)


def _reference(x, weight, bias):
    B, C, T, H, W = x.shape
    x2 = x.transpose(0, 2, 1, 3, 4).reshape(B * T, C, H, W)
    y2 = jax.lax.conv_general_dilated(
        x2, weight, window_strides=(1, 1), padding="SAME",
        dimension_numbers=("NCHW", "OIHW", "NCHW"))
    y2 = jnp.maximum(y2 + bias[None, :, None, None], 0.0)
    Cout = weight.shape[0]
    return y2.reshape(B, T, Cout, H, W).transpose(0, 2, 1, 3, 4)


if __name__ == "__main__":
    B, Cin, T, H, W = 2, 4, 4, 8, 8
    Cout, ksz = 8, 3

    key = jax.random.PRNGKey(0)
    kx, kw, kb = jax.random.split(key, 3)
    x = jax.random.normal(kx, (B, Cin, T, H, W), dtype=jnp.float32)
    # Deterministic parameter init (synthetic; not loaded from a checkpoint).
    weight = 0.1 * jax.random.normal(kw, (Cout, Cin, ksz, ksz), dtype=jnp.float32)
    bias = 0.05 * jax.random.normal(kb, (Cout,), dtype=jnp.float32)

    y = jax.block_until_ready(jax.jit(frame_wise_nn)(x, weight, bias))
    y_ref = jax.block_until_ready(_reference(x, weight, bias))

    assert y.shape == (B, Cout, T, H, W), y.shape
    assert jnp.allclose(y, y_ref, atol=1e-4, rtol=1e-4), "mismatch vs reference"
    print("KERNEL_OK")
</pallas_src>

<mosaic_0001>
module attributes {stable_mosaic.version = 11 : i64} {
  func.func @kernel(%arg0: i32, %arg1: i32, %arg2: memref<1x1x4x256xf32, #tpu.memory_space<vmem>>, %arg3: memref<9x8x4xf32, #tpu.memory_space<vmem>>, %arg4: memref<8x1xf32, #tpu.memory_space<vmem>>, %arg5: memref<1x1x8x128xf32, #tpu.memory_space<vmem>>) attributes {dimension_semantics = [#tpu.dimension_semantics<parallel>, #tpu.dimension_semantics<parallel>], iteration_bounds = array<i64: 2, 4>, scalar_prefetch = 0 : i64, scratch_operands = 0 : i64, tpu.core_type = #tpu.core_type<tc>, window_params = [{transform_indices = @transform_0, window_bounds = array<i64: 1, 1, 4, 256>}, {pipeline_mode = #tpu.pipeline_mode<synchronous>, transform_indices = @transform_1, window_bounds = array<i64: 9, 8, 4>}, {pipeline_mode = #tpu.pipeline_mode<synchronous>, transform_indices = @transform_2, window_bounds = array<i64: 8, 1>}, {transform_indices = @transform_3, window_bounds = array<i64: 1, 1, 8, 128>}]} {
    %cst = arith.constant 0.000000e+00 : f32
    %0 = vector.broadcast %cst : f32 to vector<8x128xf32>
    %c0 = arith.constant 0 : index
    %c0_0 = arith.constant 0 : index
    %c0_1 = arith.constant 0 : index
    %c0_2 = arith.constant 0 : index
    %1 = vector.load %arg2[%c0, %c0_0, %c0_1, %c0_2] : memref<1x1x4x256xf32, #tpu.memory_space<vmem>>, vector<1x1x4x128xf32>
    %2 = vector.shape_cast %1 : vector<1x1x4x128xf32> to vector<4x128xf32>
    %c0_3 = arith.constant 0 : index
    %c0_4 = arith.constant 0 : index
    %c0_5 = arith.constant 0 : index
    %3 = vector.load %arg3[%c0_3, %c0_4, %c0_5] : memref<9x8x4xf32, #tpu.memory_space<vmem>>, vector<1x8x1xf32>
    %4 = vector.shape_cast %3 : vector<1x8x1xf32> to vector<8x1xf32>
    %5 = vector.extract_strided_slice %2 {offsets = [0, 0], sizes = [1, 128], strides = [1, 1]} : vector<4x128xf32> to vector<1x128xf32>
    %6 = vector.broadcast %4 : vector<8x1xf32> to vector<8x128xf32>
    %7 = vector.broadcast %5 : vector<1x128xf32> to vector<8x128xf32>
    %8 = arith.mulf %6, %7 : vector<8x128xf32>
    %9 = arith.addf %0, %8 : vector<8x128xf32>
    %c0_6 = arith.constant 0 : index
    %c0_7 = arith.constant 0 : index
    %c1 = arith.constant 1 : index
    %10 = vector.load %arg3[%c0_6, %c0_7, %c1] : memref<9x8x4xf32, #tpu.memory_space<vmem>>, vector<1x8x1xf32>
    %11 = vector.shape_cast %10 : vector<1x8x1xf32> to vector<8x1xf32>
    %12 = vector.extract_strided_slice %2 {offsets = [1, 0], sizes = [1, 128], strides = [1, 1]} : vector<4x128xf32> to vector<1x128xf32>
    %13 = vector.broadcast %11 : vector<8x1xf32> to vector<8x128xf32>
    %14 = vector.broadcast %12 : vector<1x128xf32> to vector<8x128xf32>
    %15 = arith.mulf %13, %14 : vector<8x128xf32>
    %16 = arith.addf %9, %15 : vector<8x128xf32>
    %c0_8 = arith.constant 0 : index
    %c0_9 = arith.constant 0 : index
    %c2 = arith.constant 2 : index
    %17 = vector.load %arg3[%c0_8, %c0_9, %c2] : memref<9x8x4xf32, #tpu.memory_space<vmem>>, vector<1x8x1xf32>
    %18 = vector.shape_cast %17 : vector<1x8x1xf32> to vector<8x1xf32>
    %19 = vector.extract_strided_slice %2 {offsets = [2, 0], sizes = [1, 128], strides = [1, 1]} : vector<4x128xf32> to vector<1x128xf32>
    %20 = vector.broadcast %18 : vector<8x1xf32> to vector<8x128xf32>
    %21 = vector.broadcast %19 : vector<1x128xf32> to vector<8x128xf32>
    %22 = arith.mulf %20, %21 : vector<8x128xf32>
    %23 = arith.addf %16, %22 : vector<8x128xf32>
    %c0_10 = arith.constant 0 : index
    %c0_11 = arith.constant 0 : index
    %c3 = arith.constant 3 : index
    %24 = vector.load %arg3[%c0_10, %c0_11, %c3] : memref<9x8x4xf32, #tpu.memory_space<vmem>>, vector<1x8x1xf32>
    %25 = vector.shape_cast %24 : vector<1x8x1xf32> to vector<8x1xf32>
    %26 = vector.extract_strided_slice %2 {offsets = [3, 0], sizes = [1, 128], strides = [1, 1]} : vector<4x128xf32> to vector<1x128xf32>
    %27 = vector.broadcast %25 : vector<8x1xf32> to vector<8x128xf32>
    %28 = vector.broadcast %26 : vector<1x128xf32> to vector<8x128xf32>
    %29 = arith.mulf %27, %28 : vector<8x128xf32>
    %30 = arith.addf %23, %29 : vector<8x128xf32>
    %c0_12 = arith.constant 0 : index
    %c0_13 = arith.constant 0 : index
    %c0_14 = arith.constant 0 : index
    %c1_15 = arith.constant 1 : index
    %31 = vector.load %arg2[%c0_12, %c0_13, %c0_14, %c1_15] : memref<1x1x4x256xf32, #tpu.memory_space<vmem>>, vector<1x1x4x128xf32>
    %32 = vector.shape_cast %31 : vector<1x1x4x128xf32> to vector<4x128xf32>
    %c1_16 = arith.constant 1 : index
    %c0_17 = arith.constant 0 : index
    %c0_18 = arith.constant 0 : index
    %33 = vector.load %arg3[%c1_16, %c0_17, %c0_18] : memref<9x8x4xf32, #tpu.memory_space<vmem>>, vector<1x8x1xf32>
    %34 = vector.shape_cast %33 : vector<1x8x1xf32> to vector<8x1xf32>
    %35 = vector.extract_strided_slice %32 {offsets = [0, 0], sizes = [1, 128], strides = [1, 1]} : vector<4x128xf32> to vector<1x128xf32>
    %36 = vector.broadcast %34 : vector<8x1xf32> to vector<8x128xf32>
    %37 = vector.broadcast %35 : vector<1x128xf32> to vector<8x128xf32>
    %38 = arith.mulf %36, %37 : vector<8x128xf32>
    %39 = arith.addf %30, %38 : vector<8x128xf32>
    %c1_19 = arith.constant 1 : index
    %c0_20 = arith.constant 0 : index
    %c1_21 = arith.constant 1 : index
    %40 = vector.load %arg3[%c1_19, %c0_20, %c1_21] : memref<9x8x4xf32, #tpu.memory_space<vmem>>, vector<1x8x1xf32>
    %41 = vector.shape_cast %40 : vector<1x8x1xf32> to vector<8x1xf32>
    %42 = vector.extract_strided_slice %32 {offsets = [1, 0], sizes = [1, 128], strides = [1, 1]} : vector<4x128xf32> to vector<1x128xf32>
    %43 = vector.broadcast %41 : vector<8x1xf32> to vector<8x128xf32>
    %44 = vector.broadcast %42 : vector<1x128xf32> to vector<8x128xf32>
    %45 = arith.mulf %43, %44 : vector<8x128xf32>
    %46 = arith.addf %39, %45 : vector<8x128xf32>
    %c1_22 = arith.constant 1 : index
    %c0_23 = arith.constant 0 : index
    %c2_24 = arith.constant 2 : index
    %47 = vector.load %arg3[%c1_22, %c0_23, %c2_24] : memref<9x8x4xf32, #tpu.memory_space<vmem>>, vector<1x8x1xf32>
    %48 = vector.shape_cast %47 : vector<1x8x1xf32> to vector<8x1xf32>
    %49 = vector.extract_strided_slice %32 {offsets = [2, 0], sizes = [1, 128], strides = [1, 1]} : vector<4x128xf32> to vector<1x128xf32>
    %50 = vector.broadcast %48 : vector<8x1xf32> to vector<8x128xf32>
    %51 = vector.broadcast %49 : vector<1x128xf32> to vector<8x128xf32>
    %52 = arith.mulf %50, %51 : vector<8x128xf32>
    %53 = arith.addf %46, %52 : vector<8x128xf32>
    %c1_25 = arith.constant 1 : index
    %c0_26 = arith.constant 0 : index
    %c3_27 = arith.constant 3 : index
    %54 = vector.load %arg3[%c1_25, %c0_26, %c3_27] : memref<9x8x4xf32, #tpu.memory_space<vmem>>, vector<1x8x1xf32>
    %55 = vector.shape_cast %54 : vector<1x8x1xf32> to vector<8x1xf32>
    %56 = vector.extract_strided_slice %32 {offsets = [3, 0], sizes = [1, 128], strides = [1, 1]} : vector<4x128xf32> to vector<1x128xf32>
    %57 = vector.broadcast %55 : vector<8x1xf32> to vector<8x128xf32>
    %58 = vector.broadcast %56 : vector<1x128xf32> to vector<8x128xf32>
    %59 = arith.mulf %57, %58 : vector<8x128xf32>
    %60 = arith.addf %53, %59 : vector<8x128xf32>
    %c0_28 = arith.constant 0 : index
    %c0_29 = arith.constant 0 : index
    %c0_30 = arith.constant 0 : index
    %c2_31 = arith.constant 2 : index
    %61 = vector.load %arg2[%c0_28, %c0_29, %c0_30, %c2_31] : memref<1x1x4x256xf32, #tpu.memory_space<vmem>>, vector<1x1x4x128xf32>
    %62 = vector.shape_cast %61 : vector<1x1x4x128xf32> to vector<4x128xf32>
    %c2_32 = arith.constant 2 : index
    %c0_33 = arith.constant 0 : index
    %c0_34 = arith.constant 0 : index
    %63 = vector.load %arg3[%c2_32, %c0_33, %c0_34] : memref<9x8x4xf32, #tpu.memory_space<vmem>>, vector<1x8x1xf32>
    %64 = vector.shape_cast %63 : vector<1x8x1xf32> to vector<8x1xf32>
    %65 = vector.extract_strided_slice %62 {offsets = [0, 0], sizes = [1, 128], strides = [1, 1]} : vector<4x128xf32> to vector<1x128xf32>
    %66 = vector.broadcast %64 : vector<8x1xf32> to vector<8x128xf32>
    %67 = vector.broadcast %65 : vector<1x128xf32> to vector<8x128xf32>
    %68 = arith.mulf %66, %67 : vector<8x128xf32>
    %69 = arith.addf %60, %68 : vector<8x128xf32>
    %c2_35 = arith.constant 2 : index
    %c0_36 = arith.constant 0 : index
    %c1_37 = arith.constant 1 : index
    %70 = vector.load %arg3[%c2_35, %c0_36, %c1_37] : memref<9x8x4xf32, #tpu.memory_space<vmem>>, vector<1x8x1xf32>
    %71 = vector.shape_cast %70 : vector<1x8x1xf32> to vector<8x1xf32>
    %72 = vector.extract_strided_slice %62 {offsets = [1, 0], sizes = [1, 128], strides = [1, 1]} : vector<4x128xf32> to vector<1x128xf32>
    %73 = vector.broadcast %71 : vector<8x1xf32> to vector<8x128xf32>
    %74 = vector.broadcast %72 : vector<1x128xf32> to vector<8x128xf32>
    %75 = arith.mulf %73, %74 : vector<8x128xf32>
    %76 = arith.addf %69, %75 : vector<8x128xf32>
    %c2_38 = arith.constant 2 : index
    %c0_39 = arith.constant 0 : index
    %c2_40 = arith.constant 2 : index
    %77 = vector.load %arg3[%c2_38, %c0_39, %c2_40] : memref<9x8x4xf32, #tpu.memory_space<vmem>>, vector<1x8x1xf32>
    %78 = vector.shape_cast %77 : vector<1x8x1xf32> to vector<8x1xf32>
    %79 = vector.extract_strided_slice %62 {offsets = [2, 0], sizes = [1, 128], strides = [1, 1]} : vector<4x128xf32> to vector<1x128xf32>
    %80 = vector.broadcast %78 : vector<8x1xf32> to vector<8x128xf32>
    %81 = vector.broadcast %79 : vector<1x128xf32> to vector<8x128xf32>
    %82 = arith.mulf %80, %81 : vector<8x128xf32>
    %83 = arith.addf %76, %82 : vector<8x128xf32>
    %c2_41 = arith.constant 2 : index
    %c0_42 = arith.constant 0 : index
    %c3_43 = arith.constant 3 : index
    %84 = vector.load %arg3[%c2_41, %c0_42, %c3_43] : memref<9x8x4xf32, #tpu.memory_space<vmem>>, vector<1x8x1xf32>
    %85 = vector.shape_cast %84 : vector<1x8x1xf32> to vector<8x1xf32>
    %86 = vector.extract_strided_slice %62 {offsets = [3, 0], sizes = [1, 128], strides = [1, 1]} : vector<4x128xf32> to vector<1x128xf32>
    %87 = vector.broadcast %85 : vector<8x1xf32> to vector<8x128xf32>
    %88 = vector.broadcast %86 : vector<1x128xf32> to vector<8x128xf32>
    %89 = arith.mulf %87, %88 : vector<8x128xf32>
    %90 = arith.addf %83, %89 : vector<8x128xf32>
    %c0_44 = arith.constant 0 : index
    %c0_45 = arith.constant 0 : index
    %c0_46 = arith.constant 0 : index
    %c10 = arith.constant 10 : index
    %91 = vector.load %arg2[%c0_44, %c0_45, %c0_46, %c10] : memref<1x1x4x256xf32, #tpu.memory_space<vmem>>, vector<1x1x4x128xf32>
    %92 = vector.shape_cast %91 : vector<1x1x4x128xf32> to vector<4x128xf32>
    %c3_47 = arith.constant 3 : index
    %c0_48 = arith.constant 0 : index
    %c0_49 = arith.constant 0 : index
    %93 = vector.load %arg3[%c3_47, %c0_48, %c0_49] : memref<9x8x4xf32, #tpu.memory_space<vmem>>, vector<1x8x1xf32>
    %94 = vector.shape_cast %93 : vector<1x8x1xf32> to vector<8x1xf32>
    %95 = vector.extract_strided_slice %92 {offsets = [0, 0], sizes = [1, 128], strides = [1, 1]} : vector<4x128xf32> to vector<1x128xf32>
    %96 = vector.broadcast %94 : vector<8x1xf32> to vector<8x128xf32>
    %97 = vector.broadcast %95 : vector<1x128xf32> to vector<8x128xf32>
    %98 = arith.mulf %96, %97 : vector<8x128xf32>
    %99 = arith.addf %90, %98 : vector<8x128xf32>
    %c3_50 = arith.constant 3 : index
    %c0_51 = arith.constant 0 : index
    %c1_52 = arith.constant 1 : index
    %100 = vector.load %arg3[%c3_50, %c0_51, %c1_52] : memref<9x8x4xf32, #tpu.memory_space<vmem>>, vector<1x8x1xf32>
    %101 = vector.shape_cast %100 : vector<1x8x1xf32> to vector<8x1xf32>
    %102 = vector.extract_strided_slice %92 {offsets = [1, 0], sizes = [1, 128], strides = [1, 1]} : vector<4x128xf32> to vector<1x128xf32>
    %103 = vector.broadcast %101 : vector<8x1xf32> to vector<8x128xf32>
    %104 = vector.broadcast %102 : vector<1x128xf32> to vector<8x128xf32>
    %105 = arith.mulf %103, %104 : vector<8x128xf32>
    %106 = arith.addf %99, %105 : vector<8x128xf32>
    %c3_53 = arith.constant 3 : index
    %c0_54 = arith.constant 0 : index
    %c2_55 = arith.constant 2 : index
    %107 = vector.load %arg3[%c3_53, %c0_54, %c2_55] : memref<9x8x4xf32, #tpu.memory_space<vmem>>, vector<1x8x1xf32>
    %108 = vector.shape_cast %107 : vector<1x8x1xf32> to vector<8x1xf32>
    %109 = vector.extract_strided_slice %92 {offsets = [2, 0], sizes = [1, 128], strides = [1, 1]} : vector<4x128xf32> to vector<1x128xf32>
    %110 = vector.broadcast %108 : vector<8x1xf32> to vector<8x128xf32>
    %111 = vector.broadcast %109 : vector<1x128xf32> to vector<8x128xf32>
    %112 = arith.mulf %110, %111 : vector<8x128xf32>
    %113 = arith.addf %106, %112 : vector<8x128xf32>
    %c3_56 = arith.constant 3 : index
    %c0_57 = arith.constant 0 : index
    %c3_58 = arith.constant 3 : index
    %114 = vector.load %arg3[%c3_56, %c0_57, %c3_58] : memref<9x8x4xf32, #tpu.memory_space<vmem>>, vector<1x8x1xf32>
    %115 = vector.shape_cast %114 : vector<1x8x1xf32> to vector<8x1xf32>
    %116 = vector.extract_strided_slice %92 {offsets = [3, 0], sizes = [1, 128], strides = [1, 1]} : vector<4x128xf32> to vector<1x128xf32>
    %117 = vector.broadcast %115 : vector<8x1xf32> to vector<8x128xf32>
    %118 = vector.broadcast %116 : vector<1x128xf32> to vector<8x128xf32>
    %119 = arith.mulf %117, %118 : vector<8x128xf32>
    %120 = arith.addf %113, %119 : vector<8x128xf32>
    %c0_59 = arith.constant 0 : index
    %c0_60 = arith.constant 0 : index
    %c0_61 = arith.constant 0 : index
    %c11 = arith.constant 11 : index
    %121 = vector.load %arg2[%c0_59, %c0_60, %c0_61, %c11] : memref<1x1x4x256xf32, #tpu.memory_space<vmem>>, vector<1x1x4x128xf32>
    %122 = vector.shape_cast %121 : vector<1x1x4x128xf32> to vector<4x128xf32>
    %c4 = arith.constant 4 : index
    %c0_62 = arith.constant 0 : index
    %c0_63 = arith.constant 0 : index
    %123 = vector.load %arg3[%c4, %c0_62, %c0_63] : memref<9x8x4xf32, #tpu.memory_space<vmem>>, vector<1x8x1xf32>
    %124 = vector.shape_cast %123 : vector<1x8x1xf32> to vector<8x1xf32>
    %125 = vector.extract_strided_slice %122 {offsets = [0, 0], sizes = [1, 128], strides = [1, 1]} : vector<4x128xf32> to vector<1x128xf32>
    %126 = vector.broadcast %124 : vector<8x1xf32> to vector<8x128xf32>
    %127 = vector.broadcast %125 : vector<1x128xf32> to vector<8x128xf32>
    %128 = arith.mulf %126, %127 : vector<8x128xf32>
    %129 = arith.addf %120, %128 : vector<8x128xf32>
    %c4_64 = arith.constant 4 : index
    %c0_65 = arith.constant 0 : index
    %c1_66 = arith.constant 1 : index
    %130 = vector.load %arg3[%c4_64, %c0_65, %c1_66] : memref<9x8x4xf32, #tpu.memory_space<vmem>>, vector<1x8x1xf32>
    %131 = vector.shape_cast %130 : vector<1x8x1xf32> to vector<8x1xf32>
    %132 = vector.extract_strided_slice %122 {offsets = [1, 0], sizes = [1, 128], strides = [1, 1]} : vector<4x128xf32> to vector<1x128xf32>
    %133 = vector.broadcast %131 : vector<8x1xf32> to vector<8x128xf32>
    %134 = vector.broadcast %132 : vector<1x128xf32> to vector<8x128xf32>
    %135 = arith.mulf %133, %134 : vector<8x128xf32>
    %136 = arith.addf %129, %135 : vector<8x128xf32>
    %c4_67 = arith.constant 4 : index
    %c0_68 = arith.constant 0 : index
    %c2_69 = arith.constant 2 : index
    %137 = vector.load %arg3[%c4_67, %c0_68, %c2_69] : memref<9x8x4xf32, #tpu.memory_space<vmem>>, vector<1x8x1xf32>
    %138 = vector.shape_cast %137 : vector<1x8x1xf32> to vector<8x1xf32>
    %139 = vector.extract_strided_slice %122 {offsets = [2, 0], sizes = [1, 128], strides = [1, 1]} : vector<4x128xf32> to vector<1x128xf32>
    %140 = vector.broadcast %138 : vector<8x1xf32> to vector<8x128xf32>
    %141 = vector.broadcast %139 : vector<1x128xf32> to vector<8x128xf32>
    %142 = arith.mulf %140, %141 : vector<8x128xf32>
    %143 = arith.addf %136, %142 : vector<8x128xf32>
    %c4_70 = arith.constant 4 : index
    %c0_71 = arith.constant 0 : index
    %c3_72 = arith.constant 3 : index
    %144 = vector.load %arg3[%c4_70, %c0_71, %c3_72] : memref<9x8x4xf32, #tpu.memory_space<vmem>>, vector<1x8x1xf32>
    %145 = vector.shape_cast %144 : vector<1x8x1xf32> to vector<8x1xf32>
    %146 = vector.extract_strided_slice %122 {offsets = [3, 0], sizes = [1, 128], strides = [1, 1]} : vector<4x128xf32> to vector<1x128xf32>
    %147 = vector.broadcast %145 : vector<8x1xf32> to vector<8x128xf32>
    %148 = vector.broadcast %146 : vector<1x128xf32> to vector<8x128xf32>
    %149 = arith.mulf %147, %148 : vector<8x128xf32>
    %150 = arith.addf %143, %149 : vector<8x128xf32>
    %c0_73 = arith.constant 0 : index
    %c0_74 = arith.constant 0 : index
    %c0_75 = arith.constant 0 : index
    %c12 = arith.constant 12 : index
    %151 = vector.load %arg2[%c0_73, %c0_74, %c0_75, %c12] : memref<1x1x4x256xf32, #tpu.memory_space<vmem>>, vector<1x1x4x128xf32>
    %152 = vector.shape_cast %151 : vector<1x1x4x128xf32> to vector<4x128xf32>
    %c5 = arith.constant 5 : index
    %c0_76 = arith.constant 0 : index
    %c0_77 = arith.constant 0 : index
    %153 = vector.load %arg3[%c5, %c0_76, %c0_77] : memref<9x8x4xf32, #tpu.memory_space<vmem>>, vector<1x8x1xf32>
    %154 = vector.shape_cast %153 : vector<1x8x1xf32> to vector<8x1xf32>
    %155 = vector.extract_strided_slice %152 {offsets = [0, 0], sizes = [1, 128], strides = [1, 1]} : vector<4x128xf32> to vector<1x128xf32>
    %156 = vector.broadcast %154 : vector<8x1xf32> to vector<8x128xf32>
    %157 = vector.broadcast %155 : vector<1x128xf32> to vector<8x128xf32>
    %158 = arith.mulf %156, %157 : vector<8x128xf32>
    %159 = arith.addf %150, %158 : vector<8x128xf32>
    %c5_78 = arith.constant 5 : index
    %c0_79 = arith.constant 0 : index
    %c1_80 = arith.constant 1 : index
    %160 = vector.load %arg3[%c5_78, %c0_79, %c1_80] : memref<9x8x4xf32, #tpu.memory_space<vmem>>, vector<1x8x1xf32>
    %161 = vector.shape_cast %160 : vector<1x8x1xf32> to vector<8x1xf32>
    %162 = vector.extract_strided_slice %152 {offsets = [1, 0], sizes = [1, 128], strides = [1, 1]} : vector<4x128xf32> to vector<1x128xf32>
    %163 = vector.broadcast %161 : vector<8x1xf32> to vector<8x128xf32>
    %164 = vector.broadcast %162 : vector<1x128xf32> to vector<8x128xf32>
    %165 = arith.mulf %163, %164 : vector<8x128xf32>
    %166 = arith.addf %159, %165 : vector<8x128xf32>
    %c5_81 = arith.constant 5 : index
    %c0_82 = arith.constant 0 : index
    %c2_83 = arith.constant 2 : index
    %167 = vector.load %arg3[%c5_81, %c0_82, %c2_83] : memref<9x8x4xf32, #tpu.memory_space<vmem>>, vector<1x8x1xf32>
    %168 = vector.shape_cast %167 : vector<1x8x1xf32> to vector<8x1xf32>
    %169 = vector.extract_strided_slice %152 {offsets = [2, 0], sizes = [1, 128], strides = [1, 1]} : vector<4x128xf32> to vector<1x128xf32>
    %170 = vector.broadcast %168 : vector<8x1xf32> to vector<8x128xf32>
    %171 = vector.broadcast %169 : vector<1x128xf32> to vector<8x128xf32>
    %172 = arith.mulf %170, %171 : vector<8x128xf32>
    %173 = arith.addf %166, %172 : vector<8x128xf32>
    %c5_84 = arith.constant 5 : index
    %c0_85 = arith.constant 0 : index
    %c3_86 = arith.constant 3 : index
    %174 = vector.load %arg3[%c5_84, %c0_85, %c3_86] : memref<9x8x4xf32, #tpu.memory_space<vmem>>, vector<1x8x1xf32>
    %175 = vector.shape_cast %174 : vector<1x8x1xf32> to vector<8x1xf32>
    %176 = vector.extract_strided_slice %152 {offsets = [3, 0], sizes = [1, 128], strides = [1, 1]} : vector<4x128xf32> to vector<1x128xf32>
    %177 = vector.broadcast %175 : vector<8x1xf32> to vector<8x128xf32>
    %178 = vector.broadcast %176 : vector<1x128xf32> to vector<8x128xf32>
    %179 = arith.mulf %177, %178 : vector<8x128xf32>
    %180 = arith.addf %173, %179 : vector<8x128xf32>
    %c0_87 = arith.constant 0 : index
    %c0_88 = arith.constant 0 : index
    %c0_89 = arith.constant 0 : index
    %c20 = arith.constant 20 : index
    %181 = vector.load %arg2[%c0_87, %c0_88, %c0_89, %c20] : memref<1x1x4x256xf32, #tpu.memory_space<vmem>>, vector<1x1x4x128xf32>
    %182 = vector.shape_cast %181 : vector<1x1x4x128xf32> to vector<4x128xf32>
    %c6 = arith.constant 6 : index
    %c0_90 = arith.constant 0 : index
    %c0_91 = arith.constant 0 : index
    %183 = vector.load %arg3[%c6, %c0_90, %c0_91] : memref<9x8x4xf32, #tpu.memory_space<vmem>>, vector<1x8x1xf32>
    %184 = vector.shape_cast %183 : vector<1x8x1xf32> to vector<8x1xf32>
    %185 = vector.extract_strided_slice %182 {offsets = [0, 0], sizes = [1, 128], strides = [1, 1]} : vector<4x128xf32> to vector<1x128xf32>
    %186 = vector.broadcast %184 : vector<8x1xf32> to vector<8x128xf32>
    %187 = vector.broadcast %185 : vector<1x128xf32> to vector<8x128xf32>
    %188 = arith.mulf %186, %187 : vector<8x128xf32>
    %189 = arith.addf %180, %188 : vector<8x128xf32>
    %c6_92 = arith.constant 6 : index
    %c0_93 = arith.constant 0 : index
    %c1_94 = arith.constant 1 : index
    %190 = vector.load %arg3[%c6_92, %c0_93, %c1_94] : memref<9x8x4xf32, #tpu.memory_space<vmem>>, vector<1x8x1xf32>
    %191 = vector.shape_cast %190 : vector<1x8x1xf32> to vector<8x1xf32>
    %192 = vector.extract_strided_slice %182 {offsets = [1, 0], sizes = [1, 128], strides = [1, 1]} : vector<4x128xf32> to vector<1x128xf32>
    %193 = vector.broadcast %191 : vector<8x1xf32> to vector<8x128xf32>
    %194 = vector.broadcast %192 : vector<1x128xf32> to vector<8x128xf32>
    %195 = arith.mulf %193, %194 : vector<8x128xf32>
    %196 = arith.addf %189, %195 : vector<8x128xf32>
    %c6_95 = arith.constant 6 : index
    %c0_96 = arith.constant 0 : index
    %c2_97 = arith.constant 2 : index
    %197 = vector.load %arg3[%c6_95, %c0_96, %c2_97] : memref<9x8x4xf32, #tpu.memory_space<vmem>>, vector<1x8x1xf32>
    %198 = vector.shape_cast %197 : vector<1x8x1xf32> to vector<8x1xf32>
    %199 = vector.extract_strided_slice %182 {offsets = [2, 0], sizes = [1, 128], strides = [1, 1]} : vector<4x128xf32> to vector<1x128xf32>
    %200 = vector.broadcast %198 : vector<8x1xf32> to vector<8x128xf32>
    %201 = vector.broadcast %199 : vector<1x128xf32> to vector<8x128xf32>
    %202 = arith.mulf %200, %201 : vector<8x128xf32>
    %203 = arith.addf %196, %202 : vector<8x128xf32>
    %c6_98 = arith.constant 6 : index
    %c0_99 = arith.constant 0 : index
    %c3_100 = arith.constant 3 : index
    %204 = vector.load %arg3[%c6_98, %c0_99, %c3_100] : memref<9x8x4xf32, #tpu.memory_space<vmem>>, vector<1x8x1xf32>
    %205 = vector.shape_cast %204 : vector<1x8x1xf32> to vector<8x1xf32>
    %206 = vector.extract_strided_slice %182 {offsets = [3, 0], sizes = [1, 128], strides = [1, 1]} : vector<4x128xf32> to vector<1x128xf32>
    %207 = vector.broadcast %205 : vector<8x1xf32> to vector<8x128xf32>
    %208 = vector.broadcast %206 : vector<1x128xf32> to vector<8x128xf32>
    %209 = arith.mulf %207, %208 : vector<8x128xf32>
    %210 = arith.addf %203, %209 : vector<8x128xf32>
    %c0_101 = arith.constant 0 : index
    %c0_102 = arith.constant 0 : index
    %c0_103 = arith.constant 0 : index
    %c21 = arith.constant 21 : index
    %211 = vector.load %arg2[%c0_101, %c0_102, %c0_103, %c21] : memref<1x1x4x256xf32, #tpu.memory_space<vmem>>, vector<1x1x4x128xf32>
    %212 = vector.shape_cast %211 : vector<1x1x4x128xf32> to vector<4x128xf32>
    %c7 = arith.constant 7 : index
    %c0_104 = arith.constant 0 : index
    %c0_105 = arith.constant 0 : index
    %213 = vector.load %arg3[%c7, %c0_104, %c0_105] : memref<9x8x4xf32, #tpu.memory_space<vmem>>, vector<1x8x1xf32>
    %214 = vector.shape_cast %213 : vector<1x8x1xf32> to vector<8x1xf32>
    %215 = vector.extract_strided_slice %212 {offsets = [0, 0], sizes = [1, 128], strides = [1, 1]} : vector<4x128xf32> to vector<1x128xf32>
    %216 = vector.broadcast %214 : vector<8x1xf32> to vector<8x128xf32>
    %217 = vector.broadcast %215 : vector<1x128xf32> to vector<8x128xf32>
    %218 = arith.mulf %216, %217 : vector<8x128xf32>
    %219 = arith.addf %210, %218 : vector<8x128xf32>
    %c7_106 = arith.constant 7 : index
    %c0_107 = arith.constant 0 : index
    %c1_108 = arith.constant 1 : index
    %220 = vector.load %arg3[%c7_106, %c0_107, %c1_108] : memref<9x8x4xf32, #tpu.memory_space<vmem>>, vector<1x8x1xf32>
    %221 = vector.shape_cast %220 : vector<1x8x1xf32> to vector<8x1xf32>
    %222 = vector.extract_strided_slice %212 {offsets = [1, 0], sizes = [1, 128], strides = [1, 1]} : vector<4x128xf32> to vector<1x128xf32>
    %223 = vector.broadcast %221 : vector<8x1xf32> to vector<8x128xf32>
    %224 = vector.broadcast %222 : vector<1x128xf32> to vector<8x128xf32>
    %225 = arith.mulf %223, %224 : vector<8x128xf32>
    %226 = arith.addf %219, %225 : vector<8x128xf32>
    %c7_109 = arith.constant 7 : index
    %c0_110 = arith.constant 0 : index
    %c2_111 = arith.constant 2 : index
    %227 = vector.load %arg3[%c7_109, %c0_110, %c2_111] : memref<9x8x4xf32, #tpu.memory_space<vmem>>, vector<1x8x1xf32>
    %228 = vector.shape_cast %227 : vector<1x8x1xf32> to vector<8x1xf32>
    %229 = vector.extract_strided_slice %212 {offsets = [2, 0], sizes = [1, 128], strides = [1, 1]} : vector<4x128xf32> to vector<1x128xf32>
    %230 = vector.broadcast %228 : vector<8x1xf32> to vector<8x128xf32>
    %231 = vector.broadcast %229 : vector<1x128xf32> to vector<8x128xf32>
    %232 = arith.mulf %230, %231 : vector<8x128xf32>
    %233 = arith.addf %226, %232 : vector<8x128xf32>
    %c7_112 = arith.constant 7 : index
    %c0_113 = arith.constant 0 : index
    %c3_114 = arith.constant 3 : index
    %234 = vector.load %arg3[%c7_112, %c0_113, %c3_114] : memref<9x8x4xf32, #tpu.memory_space<vmem>>, vector<1x8x1xf32>
    %235 = vector.shape_cast %234 : vector<1x8x1xf32> to vector<8x1xf32>
    %236 = vector.extract_strided_slice %212 {offsets = [3, 0], sizes = [1, 128], strides = [1, 1]} : vector<4x128xf32> to vector<1x128xf32>
    %237 = vector.broadcast %235 : vector<8x1xf32> to vector<8x128xf32>
    %238 = vector.broadcast %236 : vector<1x128xf32> to vector<8x128xf32>
    %239 = arith.mulf %237, %238 : vector<8x128xf32>
    %240 = arith.addf %233, %239 : vector<8x128xf32>
    %c0_115 = arith.constant 0 : index
    %c0_116 = arith.constant 0 : index
    %c0_117 = arith.constant 0 : index
    %c22 = arith.constant 22 : index
    %241 = vector.load %arg2[%c0_115, %c0_116, %c0_117, %c22] : memref<1x1x4x256xf32, #tpu.memory_space<vmem>>, vector<1x1x4x128xf32>
    %242 = vector.shape_cast %241 : vector<1x1x4x128xf32> to vector<4x128xf32>
    %c8 = arith.constant 8 : index
    %c0_118 = arith.constant 0 : index
    %c0_119 = arith.constant 0 : index
    %243 = vector.load %arg3[%c8, %c0_118, %c0_119] : memref<9x8x4xf32, #tpu.memory_space<vmem>>, vector<1x8x1xf32>
    %244 = vector.shape_cast %243 : vector<1x8x1xf32> to vector<8x1xf32>
    %245 = vector.extract_strided_slice %242 {offsets = [0, 0], sizes = [1, 128], strides = [1, 1]} : vector<4x128xf32> to vector<1x128xf32>
    %246 = vector.broadcast %244 : vector<8x1xf32> to vector<8x128xf32>
    %247 = vector.broadcast %245 : vector<1x128xf32> to vector<8x128xf32>
    %248 = arith.mulf %246, %247 : vector<8x128xf32>
    %249 = arith.addf %240, %248 : vector<8x128xf32>
    %c8_120 = arith.constant 8 : index
    %c0_121 = arith.constant 0 : index
    %c1_122 = arith.constant 1 : index
    %250 = vector.load %arg3[%c8_120, %c0_121, %c1_122] : memref<9x8x4xf32, #tpu.memory_space<vmem>>, vector<1x8x1xf32>
    %251 = vector.shape_cast %250 : vector<1x8x1xf32> to vector<8x1xf32>
    %252 = vector.extract_strided_slice %242 {offsets = [1, 0], sizes = [1, 128], strides = [1, 1]} : vector<4x128xf32> to vector<1x128xf32>
    %253 = vector.broadcast %251 : vector<8x1xf32> to vector<8x128xf32>
    %254 = vector.broadcast %252 : vector<1x128xf32> to vector<8x128xf32>
    %255 = arith.mulf %253, %254 : vector<8x128xf32>
    %256 = arith.addf %249, %255 : vector<8x128xf32>
    %c8_123 = arith.constant 8 : index
    %c0_124 = arith.constant 0 : index
    %c2_125 = arith.constant 2 : index
    %257 = vector.load %arg3[%c8_123, %c0_124, %c2_125] : memref<9x8x4xf32, #tpu.memory_space<vmem>>, vector<1x8x1xf32>
    %258 = vector.shape_cast %257 : vector<1x8x1xf32> to vector<8x1xf32>
    %259 = vector.extract_strided_slice %242 {offsets = [2, 0], sizes = [1, 128], strides = [1, 1]} : vector<4x128xf32> to vector<1x128xf32>
    %260 = vector.broadcast %258 : vector<8x1xf32> to vector<8x128xf32>
    %261 = vector.broadcast %259 : vector<1x128xf32> to vector<8x128xf32>
    %262 = arith.mulf %260, %261 : vector<8x128xf32>
    %263 = arith.addf %256, %262 : vector<8x128xf32>
    %c8_126 = arith.constant 8 : index
    %c0_127 = arith.constant 0 : index
    %c3_128 = arith.constant 3 : index
    %264 = vector.load %arg3[%c8_126, %c0_127, %c3_128] : memref<9x8x4xf32, #tpu.memory_space<vmem>>, vector<1x8x1xf32>
    %265 = vector.shape_cast %264 : vector<1x8x1xf32> to vector<8x1xf32>
    %266 = vector.extract_strided_slice %242 {offsets = [3, 0], sizes = [1, 128], strides = [1, 1]} : vector<4x128xf32> to vector<1x128xf32>
    %267 = vector.broadcast %265 : vector<8x1xf32> to vector<8x128xf32>
    %268 = vector.broadcast %266 : vector<1x128xf32> to vector<8x128xf32>
    %269 = arith.mulf %267, %268 : vector<8x128xf32>
    %270 = arith.addf %263, %269 : vector<8x128xf32>
    %c0_129 = arith.constant 0 : index
    %c0_130 = arith.constant 0 : index
    %271 = vector.load %arg4[%c0_129, %c0_130] : memref<8x1xf32, #tpu.memory_space<vmem>>, vector<8x1xf32>
    %272 = vector.broadcast %271 : vector<8x1xf32> to vector<8x128xf32>
    %273 = arith.addf %270, %272 : vector<8x128xf32>
    %cst_131 = arith.constant 0.000000e+00 : f32
    %274 = vector.broadcast %cst_131 : f32 to vector<8x128xf32>
    %275 = arith.maximumf %273, %274 : vector<8x128xf32>
    %c0_132 = arith.constant 0 : index
    %c0_133 = arith.constant 0 : index
    %c0_134 = arith.constant 0 : index
    %c0_135 = arith.constant 0 : index
    %276 = vector.load %arg5[%c0_132, %c0_133, %c0_134, %c0_135] : memref<1x1x8x128xf32, #tpu.memory_space<vmem>>, vector<1x1x8x128xf32>
    %277 = vector.shape_cast %276 : vector<1x1x8x128xf32> to vector<8x128xf32>
    %278 = vector.shape_cast %275 : vector<8x128xf32> to vector<1x1x8x128xf32>
    tpu.vector_store %arg5[%c0_132, %c0_133, %c0_134, %c0_135], %278 {strides = array<i32>} : memref<1x1x8x128xf32, #tpu.memory_space<vmem>>, vector<1x1x8x128xf32>,
    return
  }
  func.func @transform_0(%arg0: i32, %arg1: i32) -> (i32, i32, i32, i32) {
    %c0_i32 = arith.constant 0 : i32
    %c0_i32_0 = arith.constant 0 : i32
    %c0_i32_1 = arith.constant 0 : i32
    return %arg0, %arg1, %c0_i32, %c0_i32_0 : i32, i32, i32, i32
  }
  func.func @transform_1(%arg0: i32, %arg1: i32) -> (i32, i32, i32) {
    %c0_i32 = arith.constant 0 : i32
    %c0_i32_0 = arith.constant 0 : i32
    %c0_i32_1 = arith.constant 0 : i32
    %c0_i32_2 = arith.constant 0 : i32
    return %c0_i32, %c0_i32_0, %c0_i32_1 : i32, i32, i32
  }
  func.func @transform_2(%arg0: i32, %arg1: i32) -> (i32, i32) {
    %c0_i32 = arith.constant 0 : i32
    %c0_i32_0 = arith.constant 0 : i32
    %c0_i32_1 = arith.constant 0 : i32
    return %c0_i32, %c0_i32_0 : i32, i32
  }
  func.func @transform_3(%arg0: i32, %arg1: i32) -> (i32, i32, i32, i32) {
    %c0_i32 = arith.constant 0 : i32
    %c0_i32_0 = arith.constant 0 : i32
    %c0_i32_1 = arith.constant 0 : i32
    return %arg0, %arg1, %c0_i32, %c0_i32_0 : i32, i32, i32, i32
  }
}

</mosaic_0001>

<llo_original>
// kernel: frame_wise_nn.1
$region0: #{frame_wise_nn.1}
  #allocation0 [shape = 'u32[]', space=smem, size = 0x4, offset = 0x4, fixed_abs, tag = 'smem constant byte address 0x4 - core index']
  #allocation1 [shape = 'u32[144,128]{1,0:T(1,128)}', space=vmem, size = 0x12000, scoped, tag = 'internal scratch']
  %s0 = inlined_call_operand.vmem [shape: f32[2,4,4,256], index: 0, kind: input, shape index: {}]
  %s1 = inlined_call_operand.vmem [shape: f32[9,8,4], index: 1, kind: input, shape index: {}]
  %s2 = inlined_call_operand.vmem [shape: f32[8,1], index: 2, kind: input, shape index: {}]
  %s3 = inlined_call_operand.vmem [shape: f32[2,4,8,128], index: 3, kind: output, shape index: {}]
  %s4 = sld [smem:[#allocation0]]
  $region45: #{frame_wise_nn.1} parent=0
    _
  %s6 = ssub.s32 1, %s4
  %s7 = scalar_select 0, %s6, %s4
  loop: start=0, step=1, limit=10
  $region2: #{frame_wise_nn.1} parent=0 // loop_pre_header
    _
  $region3: #{frame_wise_nn.1} parent=0 // loop_header
    %s9 = sphi 0, %s13
    %p10 = scmp.ge.s32.totalorder %s9, 10
    %s16 = sphi 0, %s28
    %s17 = sphi 0, %s24
    %s18 = sphi 0, %s16
    %s19 = sphi 0, %s17
    %s20 = sphi 0, %s18
    %s21 = sphi 0, %s19
    %s33 = sphi 0, %s35
    %s36 = sphi 0, %s33
    %s37 = sphi 0, %s36
    %s53 = sphi 0, %s37
    %s57 = sphi 0, %s57
    %s59 = sphi 0, %s57
    %s60 = sphi 0, %s59
    %s74 = sphi 0, %s60
    %s78 = sphi 0, %s78
    %s80 = sphi 0, %s78
    %s81 = sphi 0, %s80
    %s95 = sphi 0, %s81
    %s103 = sphi 0, %s105
    %s106 = sphi 0, %s103
    %s107 = sphi 0, %s106
    %s123 = sphi 0, %s107
  $region4: #{frame_wise_nn.1} parent=0 // loop_header_branch
    %12 = sbr.rel (%p10) target = $region8
  $region5: #{frame_wise_nn.1} parent=0 // loop_body
    %s14 = ssub.s32 %s9, 1
    %s15 = ssub.s32 %s9, 2
    %s22 = sadd.s32 1, %s17
    %p23 = scmp.ge.s32.totalorder %s22, 4
    %s24 = scalar_select %p23, 0, %s22
    %s25 = sadd.s32 1, %s16
    %s26 = scalar_select %p23, %s25, %s16
    %p27 = scmp.ge.s32.totalorder %s26, 2
    %s28 = scalar_select %p27, 0, %s26
    %s29 = ssub.s32 %s16, %s28
    %s30 = ssub.s32 %s17, %s24
    %s31 = sor.u32 %s29, %s30
    %p32 = scmp.eq.s32.totalorder %s31, 0
    %s34 = sadd.s32 %s33, 1
    %s35 = scalar_select %p32, %s33, %s34
    %p38 = pneg %p32
    %p39 = scmp.eq.s32.totalorder %s9, 7
    %p40 = por %p38, %p39
    %p41 = scmp.ne.s32.totalorder %s33, %s36
    %p42 = scmp.eq.s32.totalorder %s9, 0
    %p43 = por %p41, %p42
    %p44 = scmp.ne.s32.totalorder %s33, %s36
    %p45 = scmp.eq.s32.totalorder %s14, 7
    %p46 = por %p44, %p45
    %p47 = scmp.ne.s32.totalorder %s36, %s37
    %p48 = scmp.eq.s32.totalorder %s14, 0
    %p49 = por %p47, %p48
    %p50 = scmp.ne.s32.totalorder %s36, %s37
    %p51 = scmp.eq.s32.totalorder %s15, 7
    %p52 = por %p50, %p51
    %p54 = scmp.ne.s32.totalorder %s37, %s53
    %p55 = scmp.eq.s32.totalorder %s15, 0
    %p56 = por %p54, %p55
    %s58 = sadd.s32 %s57, 1
    %p61 = scmp.eq.s32.totalorder %s9, 7
    %p62 = scmp.ne.s32.totalorder %s57, %s59
    %p63 = scmp.eq.s32.totalorder %s9, 0
    %p64 = por %p62, %p63
    %p65 = scmp.ne.s32.totalorder %s57, %s59
    %p66 = scmp.eq.s32.totalorder %s14, 7
    %p67 = por %p65, %p66
    %p68 = scmp.ne.s32.totalorder %s59, %s60
    %p69 = scmp.eq.s32.totalorder %s14, 0
    %p70 = por %p68, %p69
    %p71 = scmp.ne.s32.totalorder %s59, %s60
    %p72 = scmp.eq.s32.totalorder %s15, 7
    %p73 = por %p71, %p72
    %p75 = scmp.ne.s32.totalorder %s60, %s74
    %p76 = scmp.eq.s32.totalorder %s15, 0
    %p77 = por %p75, %p76
    %s79 = sadd.s32 %s78, 1
    %p82 = scmp.eq.s32.totalorder %s9, 7
    %p83 = scmp.ne.s32.totalorder %s78, %s80
    %p84 = scmp.eq.s32.totalorder %s9, 0
    %p85 = por %p83, %p84
    %p86 = scmp.ne.s32.totalorder %s78, %s80
    %p87 = scmp.eq.s32.totalorder %s14, 7
    %p88 = por %p86, %p87
    %p89 = scmp.ne.s32.totalorder %s80, %s81
    %p90 = scmp.eq.s32.totalorder %s14, 0
    %p91 = por %p89, %p90
    %p92 = scmp.ne.s32.totalorder %s80, %s81
    %p93 = scmp.eq.s32.totalorder %s15, 7
    %p94 = por %p92, %p93
    %p96 = scmp.ne.s32.totalorder %s81, %s95
    %p97 = scmp.eq.s32.totalorder %s15, 0
    %p98 = por %p96, %p97
    %s99 = ssub.s32 %s16, %s28
    %s100 = ssub.s32 %s17, %s24
    %s101 = sor.u32 %s99, %s100
    %p102 = scmp.eq.s32.totalorder %s101, 0
    %s104 = sadd.s32 %s103, 1
    %s105 = scalar_select %p102, %s103, %s104
    %p108 = pneg %p102
    %p109 = scmp.eq.s32.totalorder %s9, 7
    %p110 = por %p108, %p109
    %p111 = scmp.ne.s32.totalorder %s103, %s106
    %p112 = scmp.eq.s32.totalorder %s9, 0
    %p113 = por %p111, %p112
    %p114 = scmp.ne.s32.totalorder %s103, %s106
    %p115 = scmp.eq.s32.totalorder %s14, 7
    %p116 = por %p114, %p115
    %p117 = scmp.ne.s32.totalorder %s106, %s107
    %p118 = scmp.eq.s32.totalorder %s14, 0
    %p119 = por %p117, %p118
    %p120 = scmp.ne.s32.totalorder %s106, %s107
    %p121 = scmp.eq.s32.totalorder %s15, 7
    %p122 = por %p120, %p121
    %p124 = scmp.ne.s32.totalorder %s107, %s123
    %p125 = scmp.eq.s32.totalorder %s15, 0
    %p126 = por %p124, %p125
    %p127 = scmp.le.s32.totalorder 1, %s9
    %p128 = scmp.lt.s32.totalorder %s9, 9
    %p129 = pnand %p127, %p128
    %p130 = pneg %p129
    // Predicated region
    $region9: #{frame_wise_nn.1} parent=5 // pred_check
      _
    $region10: #{frame_wise_nn.1} parent=5 // pred_check_branch
      %132 = sbr.rel (%p129) target = $region12
    $region11: #{frame_wise_nn.1} parent=5 // pred_region
      %s133 = ssub.s32 %s9, 1
      // Predicated region
      $region13: #{frame_wise_nn.1} parent=11 // pred_check
        %p134 = pneg %p70
      $region14: #{frame_wise_nn.1} parent=11 // pred_check_branch
        %136 = sbr.rel (%p134) target = $region16
      $region15: #{frame_wise_nn.1} parent=11 // pred_region
        _
      $region16: #{frame_wise_nn.1} parent=11 // pred_fallthru
        _
      // Predicated region
      $region17: #{frame_wise_nn.1} parent=11 // pred_check
        %p137 = pneg %p91
      $region18: #{frame_wise_nn.1} parent=11 // pred_check_branch
        %139 = sbr.rel (%p137) target = $region20
      $region19: #{frame_wise_nn.1} parent=11 // pred_region
        _
      $region20: #{frame_wise_nn.1} parent=11 // pred_fallthru
        _
    $region12: #{frame_wise_nn.1} parent=5 // pred_fallthru
      _
    %p140 = scmp.lt.s32.totalorder %s9, 8
    // Predicated region
    $region21: #{frame_wise_nn.1} parent=5 // pred_check
      %p141 = pneg %p140
    $region22: #{frame_wise_nn.1} parent=5 // pred_check_branch
      %143 = sbr.rel (%p141) target = $region24
    $region23: #{frame_wise_nn.1} parent=5 // pred_region
      // Predicated region
      $region25: #{frame_wise_nn.1} parent=23 // pred_check
        %p144 = pneg %p43
      $region26: #{frame_wise_nn.1} parent=23 // pred_check_branch
        %146 = sbr.rel (%p144) target = $region28
      $region27: #{frame_wise_nn.1} parent=23 // pred_region
        %p147 = scmp.lt.s32.totalorder %s16, 1
        %s148 = scalar_select %p147, %s16, 1
        %p149 = scmp.lt.s32.totalorder %s17, 3
        %s150 = scalar_select %p149, %s17, 3
        %s151 = smul.addr %s150, 2
        %s152 = smul.addr %s148, 8
        %s153 = sadd.s32 %s151, %s152
        %s154 = smul.addr %s153, 4
        %s155 = scalar_lea.vmem %s0, %s154
      $region28: #{frame_wise_nn.1} parent=23 // pred_fallthru
        _
    $region24: #{frame_wise_nn.1} parent=5 // pred_fallthru
      _
    %p156 = scmp.le.s32.totalorder 1, %s9
    %p157 = scmp.lt.s32.totalorder %s9, 9
    %p158 = pnand %p156, %p157
    %p159 = pneg %p158
    // Predicated region
    $region29: #{frame_wise_nn.1} parent=5 // pred_check
      _
    $region30: #{frame_wise_nn.1} parent=5 // pred_check_branch
      %161 = sbr.rel (%p158) target = $region32
    $region31: #{frame_wise_nn.1} parent=5 // pred_region
      %s162 = ssub.s32 %s9, 1
      %p163 = scmp.lt.s32.totalorder %s18, 1
      %s164 = scalar_select %p163, %s18, 1
      %p165 = scmp.lt.s32.totalorder %s19, 3
      %s166 = scalar_select %p165, %s19, 3
      %s167 = smul.addr %s166, 2
      %s168 = smul.addr %s164, 8
      %s169 = sadd.s32 %s167, %s168
      %s170 = smul.addr %s169, 4
      %s171 = scalar_lea.vmem %s0, %s170
      %p172 = pneg %p49
      %p173 = pneg %p46
      %p174 = pneg %p70
      %p175 = pneg %p67
      %p176 = pneg %p91
      %p177 = pneg %p88
      %p178 = pneg %p119
      %p179 = pneg %p116
      %p180 = scmp.lt.s32.totalorder %s18, 1
      %s181 = scalar_select %p180, %s18, 1
      %p182 = scmp.lt.s32.totalorder %s19, 3
      %s183 = scalar_select %p182, %s19, 3
      %s184 = smul.addr %s181, 4
      %s185 = sadd.s32 %s183, %s184
      %s186 = smul.addr %s185, 8
      %s187 = scalar_lea.vmem %s3, %s186
      %p188 = scmp.lt.s32.totalorder %s18, 1
      %s189 = scalar_select %p188, %s18, 1
      %p190 = scmp.lt.s32.totalorder %s19, 3
      %s191 = scalar_select %p190, %s19, 3
      %s192 = smul.addr %s191, 2
      %s193 = smul.addr %s189, 8
      %s194 = sadd.s32 %s192, %s193
      %s195 = smul.addr %s194, 4
      %s196 = scalar_lea.vmem %s0, %s195
      %p197 = scmp.lt.s32.totalorder %s18, 1
      %s198 = scalar_select %p197, %s18, 1
      %p199 = scmp.lt.s32.totalorder %s19, 3
      %s200 = scalar_select %p199, %s19, 3
      %s201 = smul.addr %s198, 4
      %s202 = sadd.s32 %s200, %s201
      %s203 = smul.addr %s202, 8
      %s204 = scalar_lea.vmem %s3, %s203
      %v205 = vld [vmem:[%s196] sm:$0xf]
      %v206 = vld [vmem:[%s1] sm:$0xff]
      %208 = vset.pattern.permute.xlu0 0
      %209 = vperm.xlu0 %208, %v206
      %v210 = vpop.permute.xlu0 %209
      %v212 = vlaneseq
      %v213 = vshrl.u32 %v212, 7
      %v214 = vsub.s32 0, %v213
      %v215 = vrot.slane %v205, %v214
      %v216 = vmul.f32 %v210, %v215
      %v217 = vadd.f32 %v216, 0.0
      %218 = vset.pattern.permute.xlu0 1
      %219 = vperm.xlu0 %218, %v206
      %v220 = vpop.permute.xlu0 %219
      %v222 = vlaneseq
      %v223 = vshrl.u32 %v222, 7
      %v224 = vsub.s32 1, %v223
      %v225 = vrot.slane %v205, %v224
      %v226 = vmul.f32 %v220, %v225
      %v227 = vadd.f32 %v217, %v226
      %228 = vset.pattern.permute.xlu0 2
      %229 = vperm.xlu0 %228, %v206
      %v230 = vpop.permute.xlu0 %229
      %v232 = vlaneseq
      %v233 = vshrl.u32 %v232, 7
      %v234 = vsub.s32 2, %v233
      %v235 = vrot.slane %v205, %v234
      %v236 = vmul.f32 %v230, %v235
      %v237 = vadd.f32 %v227, %v236
      %238 = vset.pattern.permute.xlu0 3
      %239 = vperm.xlu0 %238, %v206
      %v240 = vpop.permute.xlu0 %239
      %v242 = vlaneseq
      %v243 = vshrl.u32 %v242, 7
      %v244 = vsub.s32 3, %v243
      %v245 = vrot.slane %v205, %v244
      %v246 = vmul.f32 %v240, %v245
      %v247 = vadd.f32 %v237, %v246
      %v248 = vld [vmem:[%s196] sm:$0xff]
      %s249 = scalar_lea.vmem %s1, 8
      %v250 = vld [vmem:[%s249] sm:$0xff]
      %252 = vset.pattern.permute.xlu0 0
      %253 = vperm.xlu0 %252, %v250
      %v254 = vpop.permute.xlu0 %253
      %v257 = vlaneseq
      %v258 = vshrl.u32 %v257, 7
      %v259 = vsub.s32 0, %v258
      %v260 = vrot.slane %v248, %v259
      %v261 = vlaneseq
      %v262 = vshrl.u32 %v261, 7
      %v263 = vsub.s32 4, %v262
      %v264 = vrot.slane %v248, %v263
      %v267 = vlaneseq
      %v268 = vshrl.u32 %v267, 7
      %v269 = vsub.s32 0, %v268
      %v270 = vrot.slane %v260, %v269
      %v271 = vlaneseq
      %v272 = vshrl.u32 %v271, 7
      %v273 = vsub.s32 0, %v272
      %v274 = vrot.slane %v264, %v273
      %v275 = vmul.f32 %v254, %v270
      %v276 = vmul.f32 %v254, %v274
      %279 = vrot.lane.b32.xlu0 %v275, 127
      %v280 = vpop.permute.xlu0 %279
      %281 = vrot.lane.b32.xlu0 %v276, 127
      %v282 = vpop.permute.xlu0 %281
      %vm283 = vcmask 1039360
      %v284 = vsel %vm283, %v280, %v282
      %v286 = vadd.f32 %v247, %v284
      %287 = vset.pattern.permute.xlu0 1
      %288 = vperm.xlu0 %287, %v250
      %v289 = vpop.permute.xlu0 %288
      %v291 = vlaneseq
      %v292 = vshrl.u32 %v291, 7
      %v293 = vsub.s32 1, %v292
      %v294 = vrot.slane %v248, %v293
      %v295 = vlaneseq
      %v296 = vshrl.u32 %v295, 7
      %v297 = vsub.s32 5, %v296
      %v298 = vrot.slane %v248, %v297
      %v301 = vlaneseq
      %v302 = vshrl.u32 %v301, 7
      %v303 = vsub.s32 1, %v302
      %v304 = vrot.slane %v294, %v303
      %v305 = vlaneseq
      %v306 = vshrl.u32 %v305, 7
      %v307 = vsub.s32 1, %v306
      %v308 = vrot.slane %v298, %v307
      %v309 = vmul.f32 %v289, %v304
      %v310 = vmul.f32 %v289, %v308
      %313 = vrot.lane.b32.xlu0 %v309, 127
      %v314 = vpop.permute.xlu0 %313
      %315 = vrot.lane.b32.xlu0 %v310, 127
      %v316 = vpop.permute.xlu0 %315
      %v317 = vsel %vm283, %v314, %v316
      %v319 = vadd.f32 %v286, %v317
      %320 = vset.pattern.permute.xlu0 2
      %321 = vperm.xlu0 %320, %v250
      %v322 = vpop.permute.xlu0 %321
      %v324 = vlaneseq
      %v325 = vshrl.u32 %v324, 7
      %v326 = vsub.s32 2, %v325
      %v327 = vrot.slane %v248, %v326
      %v328 = vlaneseq
      %v329 = vshrl.u32 %v328, 7
      %v330 = vsub.s32 6, %v329
      %v331 = vrot.slane %v248, %v330
      %v334 = vlaneseq
      %v335 = vshrl.u32 %v334, 7
      %v336 = vsub.s32 2, %v335
      %v337 = vrot.slane %v327, %v336
      %v338 = vlaneseq
      %v339 = vshrl.u32 %v338, 7
      %v340 = vsub.s32 2, %v339
      %v341 = vrot.slane %v331, %v340
      %v342 = vmul.f32 %v322, %v337
      %v343 = vmul.f32 %v322, %v341
      %346 = vrot.lane.b32.xlu0 %v342, 127
      %v347 = vpop.permute.xlu0 %346
      %348 = vrot.lane.b32.xlu0 %v343, 127
      %v349 = vpop.permute.xlu0 %348
      %v350 = vsel %vm283, %v347, %v349
      %v352 = vadd.f32 %v319, %v350
      %353 = vset.pattern.permute.xlu0 3
      %354 = vperm.xlu0 %353, %v250
      %v355 = vpop.permute.xlu0 %354
      %v357 = vlaneseq
      %v358 = vshrl.u32 %v357, 7
      %v359 = vsub.s32 3, %v358
      %v360 = vrot.slane %v248, %v359
      %v361 = vlaneseq
      %v362 = vshrl.u32 %v361, 7
      %v363 = vsub.s32 7, %v362
      %v364 = vrot.slane %v248, %v363
      %v367 = vlaneseq
      %v368 = vshrl.u32 %v367, 7
      %v369 = vsub.s32 3, %v368
      %v370 = vrot.slane %v360, %v369
      %v371 = vlaneseq
      %v372 = vshrl.u32 %v371, 7
      %v373 = vsub.s32 3, %v372
      %v374 = vrot.slane %v364, %v373
      %v375 = vmul.f32 %v355, %v370
      %v376 = vmul.f32 %v355, %v374
      %379 = vrot.lane.b32.xlu0 %v375, 127
      %v380 = vpop.permute.xlu0 %379
      %381 = vrot.lane.b32.xlu0 %v376, 127
      %v382 = vpop.permute.xlu0 %381
      %v383 = vsel %vm283, %v380, %v382
      %v385 = vadd.f32 %v352, %v383
      %s386 = scalar_lea.vmem %s1, 16
      %v387 = vld [vmem:[%s386] sm:$0xff]
      %389 = vset.pattern.permute.xlu0 0
      %390 = vperm.xlu0 %389, %v387
      %v391 = vpop.permute.xlu0 %390
      %v393 = vmul.f32 %v391, %v270
      %v394 = vmul.f32 %v391, %v274
      %397 = vrot.lane.b32.xlu0 %v393, 126
      %v398 = vpop.permute.xlu0 %397
      %399 = vrot.lane.b32.xlu0 %v394, 126
      %v400 = vpop.permute.xlu0 %399
      %vm401 = vcmask 1031168
      %v402 = vsel %vm401, %v398, %v400
      %v404 = vadd.f32 %v385, %v402
      %405 = vset.pattern.permute.xlu0 1
      %406 = vperm.xlu0 %405, %v387
      %v407 = vpop.permute.xlu0 %406
      %v409 = vmul.f32 %v407, %v304
      %v410 = vmul.f32 %v407, %v308
      %413 = vrot.lane.b32.xlu0 %v409, 126
      %v414 = vpop.permute.xlu0 %413
      %415 = vrot.lane.b32.xlu0 %v410, 126
      %v416 = vpop.permute.xlu0 %415
      %v417 = vsel %vm401, %v414, %v416
      %v419 = vadd.f32 %v404, %v417
      %420 = vset.pattern.permute.xlu0 2
      %421 = vperm.xlu0 %420, %v387
      %v422 = vpop.permute.xlu0 %421
      %v424 = vmul.f32 %v422, %v337
      %v425 = vmul.f32 %v422, %v341
      %428 = vrot.lane.b32.xlu0 %v424, 126
      %v429 = vpop.permute.xlu0 %428
      %430 = vrot.lane.b32.xlu0 %v425, 126
      %v431 = vpop.permute.xlu0 %430
      %v432 = vsel %vm401, %v429, %v431
      %v434 = vadd.f32 %v419, %v432
      %435 = vset.pattern.permute.xlu0 3
      %436 = vperm.xlu0 %435, %v387
      %v437 = vpop.permute.xlu0 %436
      %v439 = vmul.f32 %v437, %v370
      %v440 = vmul.f32 %v437, %v374
      %443 = vrot.lane.b32.xlu0 %v439, 126
      %v444 = vpop.permute.xlu0 %443
      %445 = vrot.lane.b32.xlu0 %v440, 126
      %v446 = vpop.permute.xlu0 %445
      %v447 = vsel %vm401, %v444, %v446
      %v449 = vadd.f32 %v434, %v447
      %s450 = scalar_lea.vmem %s1, 24
      %v451 = vld [vmem:[%s450] sm:$0xff]
      %453 = vset.pattern.permute.xlu0 0
      %454 = vperm.xlu0 %453, %v451
      %v455 = vpop.permute.xlu0 %454
      %v457 = vmul.f32 %v455, %v270
      %v458 = vmul.f32 %v455, %v274
      %461 = vrot.lane.b32.xlu0 %v457, 118
      %v462 = vpop.permute.xlu0 %461
      %463 = vrot.lane.b32.xlu0 %v458, 118
      %v464 = vpop.permute.xlu0 %463
      %vm465 = vcmask 965632
      %v466 = vsel %vm465, %v462, %v464
      %v468 = vadd.f32 %v449, %v466
      %469 = vset.pattern.permute.xlu0 1
      %470 = vperm.xlu0 %469, %v451
      %v471 = vpop.permute.xlu0 %470
      %v473 = vmul.f32 %v471, %v304
      %v474 = vmul.f32 %v471, %v308
      %477 = vrot.lane.b32.xlu0 %v473, 118
      %v478 = vpop.permute.xlu0 %477
      %479 = vrot.lane.b32.xlu0 %v474, 118
      %v480 = vpop.permute.xlu0 %479
      %v481 = vsel %vm465, %v478, %v480
      %v483 = vadd.f32 %v468, %v481
      %484 = vset.pattern.permute.xlu0 2
      %485 = vperm.xlu0 %484, %v451
      %v486 = vpop.permute.xlu0 %485
      %v488 = vmul.f32 %v486, %v337
      %v489 = vmul.f32 %v486, %v341
      %492 = vrot.lane.b32.xlu0 %v488, 118
      %v493 = vpop.permute.xlu0 %492
      %494 = vrot.lane.b32.xlu0 %v489, 118
      %v495 = vpop.permute.xlu0 %494
      %v496 = vsel %vm465, %v493, %v495
      %v498 = vadd.f32 %v483, %v496
      %499 = vset.pattern.permute.xlu0 3
      %500 = vperm.xlu0 %499, %v451
      %v501 = vpop.permute.xlu0 %500
      %v503 = vmul.f32 %v501, %v370
      %v504 = vmul.f32 %v501, %v374
      %507 = vrot.lane.b32.xlu0 %v503, 118
      %v508 = vpop.permute.xlu0 %507
      %509 = vrot.lane.b32.xlu0 %v504, 118
      %v510 = vpop.permute.xlu0 %509
      %v511 = vsel %vm465, %v508, %v510
      %v513 = vadd.f32 %v498, %v511
      %s514 = scalar_lea.vmem %s1, 32
      %v515 = vld [vmem:[%s514] sm:$0xff]
      %517 = vset.pattern.permute.xlu0 0
      %518 = vperm.xlu0 %517, %v515
      %v519 = vpop.permute.xlu0 %518
      %v521 = vmul.f32 %v519, %v270
      %v522 = vmul.f32 %v519, %v274
      %525 = vrot.lane.b32.xlu0 %v521, 117
      %v526 = vpop.permute.xlu0 %525
      %527 = vrot.lane.b32.xlu0 %v522, 117
      %v528 = vpop.permute.xlu0 %527
      %vm529 = vcmask 957440
      %v530 = vsel %vm529, %v526, %v528
      %v532 = vadd.f32 %v513, %v530
      %533 = vset.pattern.permute.xlu0 1
      %534 = vperm.xlu0 %533, %v515
      %v535 = vpop.permute.xlu0 %534
      %v537 = vmul.f32 %v535, %v304
      %v538 = vmul.f32 %v535, %v308
      %541 = vrot.lane.b32.xlu0 %v537, 117
      %v542 = vpop.permute.xlu0 %541
      %543 = vrot.lane.b32.xlu0 %v538, 117
      %v544 = vpop.permute.xlu0 %543
      %v545 = vsel %vm529, %v542, %v544
      %v547 = vadd.f32 %v532, %v545
      %548 = vset.pattern.permute.xlu0 2
      %549 = vperm.xlu0 %548, %v515
      %v550 = vpop.permute.xlu0 %549
      %v552 = vmul.f32 %v550, %v337
      %v553 = vmul.f32 %v550, %v341
      %556 = vrot.lane.b32.xlu0 %v552, 117
      %v557 = vpop.permute.xlu0 %556
      %558 = vrot.lane.b32.xlu0 %v553, 117
      %v559 = vpop.permute.xlu0 %558
      %v560 = vsel %vm529, %v557, %v559
      %v562 = vadd.f32 %v547, %v560
      %563 = vset.pattern.permute.xlu0 3
      %564 = vperm.xlu0 %563, %v515
      %v565 = vpop.permute.xlu0 %564
      %v567 = vmul.f32 %v565, %v370
      %v568 = vmul.f32 %v565, %v374
      %571 = vrot.lane.b32.xlu0 %v567, 117
      %v572 = vpop.permute.xlu0 %571
      %573 = vrot.lane.b32.xlu0 %v568, 117
      %v574 = vpop.permute.xlu0 %573
      %v575 = vsel %vm529, %v572, %v574
      %v577 = vadd.f32 %v562, %v575
      %s578 = scalar_lea.vmem %s1, 40
      %v579 = vld [vmem:[%s578] sm:$0xff]
      %581 = vset.pattern.permute.xlu0 0
      %582 = vperm.xlu0 %581, %v579
      %v583 = vpop.permute.xlu0 %582
      %v585 = vmul.f32 %v583, %v270
      %v586 = vmul.f32 %v583, %v274
      %589 = vrot.lane.b32.xlu0 %v585, 116
      %v590 = vpop.permute.xlu0 %589
      %591 = vrot.lane.b32.xlu0 %v586, 116
      %v592 = vpop.permute.xlu0 %591
      %vm593 = vcmask 949248
      %v594 = vsel %vm593, %v590, %v592
      %v596 = vadd.f32 %v577, %v594
      %597 = vset.pattern.permute.xlu0 1
      %598 = vperm.xlu0 %597, %v579
      %v599 = vpop.permute.xlu0 %598
      %v601 = vmul.f32 %v599, %v304
      %v602 = vmul.f32 %v599, %v308
      %605 = vrot.lane.b32.xlu0 %v601, 116
      %v606 = vpop.permute.xlu0 %605
      %607 = vrot.lane.b32.xlu0 %v602, 116
      %v608 = vpop.permute.xlu0 %607
      %v609 = vsel %vm593, %v606, %v608
      %v611 = vadd.f32 %v596, %v609
      %612 = vset.pattern.permute.xlu0 2
      %613 = vperm.xlu0 %612, %v579
      %v614 = vpop.permute.xlu0 %613
      %v616 = vmul.f32 %v614, %v337
      %v617 = vmul.f32 %v614, %v341
      %620 = vrot.lane.b32.xlu0 %v616, 116
      %v621 = vpop.permute.xlu0 %620
      %622 = vrot.lane.b32.xlu0 %v617, 116
      %v623 = vpop.permute.xlu0 %622
      %v624 = vsel %vm593, %v621, %v623
      %v626 = vadd.f32 %v611, %v624
      %627 = vset.pattern.permute.xlu0 3
      %628 = vperm.xlu0 %627, %v579
      %v629 = vpop.permute.xlu0 %628
      %v631 = vmul.f32 %v629, %v370
      %v632 = vmul.f32 %v629, %v374
      %635 = vrot.lane.b32.xlu0 %v631, 116
      %v636 = vpop.permute.xlu0 %635
      %637 = vrot.lane.b32.xlu0 %v632, 116
      %v638 = vpop.permute.xlu0 %637
      %v639 = vsel %vm593, %v636, %v638
      %v641 = vadd.f32 %v626, %v639
      %s642 = scalar_lea.vmem %s1, 48
      %v643 = vld [vmem:[%s642] sm:$0xff]
      %645 = vset.pattern.permute.xlu0 0
      %646 = vperm.xlu0 %645, %v643
      %v647 = vpop.permute.xlu0 %646
      %v649 = vmul.f32 %v647, %v270
      %v650 = vmul.f32 %v647, %v274
      %653 = vrot.lane.b32.xlu0 %v649, 108
      %v654 = vpop.permute.xlu0 %653
      %655 = vrot.lane.b32.xlu0 %v650, 108
      %v656 = vpop.permute.xlu0 %655
      %vm657 = vcmask 883712
      %v658 = vsel %vm657, %v654, %v656
      %v660 = vadd.f32 %v641, %v658
      %661 = vset.pattern.permute.xlu0 1
      %662 = vperm.xlu0 %661, %v643
      %v663 = vpop.permute.xlu0 %662
      %v665 = vmul.f32 %v663, %v304
      %v666 = vmul.f32 %v663, %v308
      %669 = vrot.lane.b32.xlu0 %v665, 108
      %v670 = vpop.permute.xlu0 %669
      %671 = vrot.lane.b32.xlu0 %v666, 108
      %v672 = vpop.permute.xlu0 %671
      %v673 = vsel %vm657, %v670, %v672
      %v675 = vadd.f32 %v660, %v673
      %676 = vset.pattern.permute.xlu0 2
      %677 = vperm.xlu0 %676, %v643
      %v678 = vpop.permute.xlu0 %677
      %v680 = vmul.f32 %v678, %v337
      %v681 = vmul.f32 %v678, %v341
      %684 = vrot.lane.b32.xlu0 %v680, 108
      %v685 = vpop.permute.xlu0 %684
      %686 = vrot.lane.b32.xlu0 %v681, 108
      %v687 = vpop.permute.xlu0 %686
      %v688 = vsel %vm657, %v685, %v687
      %v690 = vadd.f32 %v675, %v688
      %691 = vset.pattern.permute.xlu0 3
      %692 = vperm.xlu0 %691, %v643
      %v693 = vpop.permute.xlu0 %692
      %v695 = vmul.f32 %v693, %v370
      %v696 = vmul.f32 %v693, %v374
      %699 = vrot.lane.b32.xlu0 %v695, 108
      %v700 = vpop.permute.xlu0 %699
      %701 = vrot.lane.b32.xlu0 %v696, 108
      %v702 = vpop.permute.xlu0 %701
      %v703 = vsel %vm657, %v700, %v702
      %v705 = vadd.f32 %v690, %v703
      %s706 = scalar_lea.vmem %s1, 56
      %v707 = vld [vmem:[%s706] sm:$0xff]
      %709 = vset.pattern.permute.xlu0 0
      %710 = vperm.xlu0 %709, %v707
      %v711 = vpop.permute.xlu0 %710
      %v713 = vmul.f32 %v711, %v270
      %v714 = vmul.f32 %v711, %v274
      %717 = vrot.lane.b32.xlu0 %v713, 107
      %v718 = vpop.permute.xlu0 %717
      %719 = vrot.lane.b32.xlu0 %v714, 107
      %v720 = vpop.permute.xlu0 %719
      %vm721 = vcmask 875520
      %v722 = vsel %vm721, %v718, %v720
      %v724 = vadd.f32 %v705, %v722
      %725 = vset.pattern.permute.xlu0 1
      %726 = vperm.xlu0 %725, %v707
      %v727 = vpop.permute.xlu0 %726
      %v729 = vmul.f32 %v727, %v304
      %v730 = vmul.f32 %v727, %v308
      %733 = vrot.lane.b32.xlu0 %v729, 107
      %v734 = vpop.permute.xlu0 %733
      %735 = vrot.lane.b32.xlu0 %v730, 107
      %v736 = vpop.permute.xlu0 %735
      %v737 = vsel %vm721, %v734, %v736
      %v739 = vadd.f32 %v724, %v737
      %740 = vset.pattern.permute.xlu0 2
      %741 = vperm.xlu0 %740, %v707
      %v742 = vpop.permute.xlu0 %741
      %v744 = vmul.f32 %v742, %v337
      %v745 = vmul.f32 %v742, %v341
      %748 = vrot.lane.b32.xlu0 %v744, 107
      %v749 = vpop.permute.xlu0 %748
      %750 = vrot.lane.b32.xlu0 %v745, 107
      %v751 = vpop.permute.xlu0 %750
      %v752 = vsel %vm721, %v749, %v751
      %v754 = vadd.f32 %v739, %v752
      %755 = vset.pattern.permute.xlu0 3
      %756 = vperm.xlu0 %755, %v707
      %v757 = vpop.permute.xlu0 %756
      %v759 = vmul.f32 %v757, %v370
      %v760 = vmul.f32 %v757, %v374
      %763 = vrot.lane.b32.xlu0 %v759, 107
      %v764 = vpop.permute.xlu0 %763
      %765 = vrot.lane.b32.xlu0 %v760, 107
      %v766 = vpop.permute.xlu0 %765
      %v767 = vsel %vm721, %v764, %v766
      %v769 = vadd.f32 %v754, %v767
      %s770 = scalar_lea.vmem %s1, 64
      %v771 = vld [vmem:[%s770] sm:$0xff]
      %773 = vset.pattern.permute.xlu0 0
      %774 = vperm.xlu0 %773, %v771
      %v775 = vpop.permute.xlu0 %774
      %v777 = vmul.f32 %v775, %v270
      %v778 = vmul.f32 %v775, %v274
      %781 = vrot.lane.b32.xlu0 %v777, 106
      %v782 = vpop.permute.xlu0 %781
      %783 = vrot.lane.b32.xlu0 %v778, 106
      %v784 = vpop.permute.xlu0 %783
      %vm785 = vcmask 867328
      %v786 = vsel %vm785, %v782, %v784
      %v788 = vadd.f32 %v769, %v786
      %789 = vset.pattern.permute.xlu0 1
      %790 = vperm.xlu0 %789, %v771
      %v791 = vpop.permute.xlu0 %790
      %v793 = vmul.f32 %v791, %v304
      %v794 = vmul.f32 %v791, %v308
      %797 = vrot.lane.b32.xlu0 %v793, 106
      %v798 = vpop.permute.xlu0 %797
      %799 = vrot.lane.b32.xlu0 %v794, 106
      %v800 = vpop.permute.xlu0 %799
      %v801 = vsel %vm785, %v798, %v800
      %v803 = vadd.f32 %v788, %v801
      %804 = vset.pattern.permute.xlu0 2
      %805 = vperm.xlu0 %804, %v771
      %v806 = vpop.permute.xlu0 %805
      %v808 = vmul.f32 %v806, %v337
      %v809 = vmul.f32 %v806, %v341
      %812 = vrot.lane.b32.xlu0 %v808, 106
      %v813 = vpop.permute.xlu0 %812
      %814 = vrot.lane.b32.xlu0 %v809, 106
      %v815 = vpop.permute.xlu0 %814
      %v816 = vsel %vm785, %v813, %v815
      %v818 = vadd.f32 %v803, %v816
      %819 = vset.pattern.permute.xlu0 3
      %820 = vperm.xlu0 %819, %v771
      %v821 = vpop.permute.xlu0 %820
      %v823 = vmul.f32 %v821, %v370
      %v824 = vmul.f32 %v821, %v374
      %827 = vrot.lane.b32.xlu0 %v823, 106
      %v828 = vpop.permute.xlu0 %827
      %829 = vrot.lane.b32.xlu0 %v824, 106
      %v830 = vpop.permute.xlu0 %829
      %v831 = vsel %vm785, %v828, %v830
      %v833 = vadd.f32 %v818, %v831
      %v834 = vld [vmem:[%s2] sm:$0xff]
      %836 = vset.pattern.permute.xlu0 0
      %837 = vperm.xlu0 %836, %v834
      %v838 = vpop.permute.xlu0 %837
      %v840 = vadd.f32 %v833, %v838
      %v841 = vmax.f32 %v840, 0.0
      %842 = vst [vmem:[%s204] sm:$0xff] %v841
      %p843 = scmp.lt.s32.totalorder %s18, 1
      %s844 = scalar_select %p843, %s18, 1
      %p845 = scmp.lt.s32.totalorder %s19, 3
      %s846 = scalar_select %p845, %s19, 3
      %s847 = smul.addr %s844, 4
      %s848 = sadd.s32 %s846, %s847
      %s849 = smul.addr %s848, 8
      %s850 = scalar_lea.vmem %s3, %s849
      // Predicated region
      $region33: #{frame_wise_nn.1} parent=31 // pred_check
        %p851 = pneg %p116
      $region34: #{frame_wise_nn.1} parent=31 // pred_check_branch
        %853 = sbr.rel (%p851) target = $region36
      $region35: #{frame_wise_nn.1} parent=31 // pred_region
        _
      $region36: #{frame_wise_nn.1} parent=31 // pred_fallthru
        _
    $region32: #{frame_wise_nn.1} parent=5 // pred_fallthru
      _
    %p854 = scmp.le.s32.totalorder 2, %s9
    // Predicated region
    $region37: #{frame_wise_nn.1} parent=5 // pred_check
      %p855 = pneg %p854
    $region38: #{frame_wise_nn.1} parent=5 // pred_check_branch
      %857 = sbr.rel (%p855) target = $region40
    $region39: #{frame_wise_nn.1} parent=5 // pred_region
      %s858 = ssub.s32 %s9, 2
      // Predicated region
      $region41: #{frame_wise_nn.1} parent=39 // pred_check
        %p859 = pneg %p122
      $region42: #{frame_wise_nn.1} parent=39 // pred_check_branch
        %861 = sbr.rel (%p859) target = $region44
      $region43: #{frame_wise_nn.1} parent=39 // pred_region
        %p862 = scmp.lt.s32.totalorder %s20, 1
        %s863 = scalar_select %p862, %s20, 1
        %p864 = scmp.lt.s32.totalorder %s21, 3
        %s865 = scalar_select %p864, %s21, 3
        %s866 = smul.addr %s863, 4
        %s867 = sadd.s32 %s865, %s866
        %s868 = smul.addr %s867, 8
        %s869 = scalar_lea.vmem %s3, %s868
      $region44: #{frame_wise_nn.1} parent=39 // pred_fallthru
        _
    $region40: #{frame_wise_nn.1} parent=5 // pred_fallthru
      _
  $region6: #{frame_wise_nn.1} parent=0 // loop_footer
    %s13 = sadd.s32 1, %s9
  $region7: #{frame_wise_nn.1} parent=0 // loop_footer_branch
    %8 = sbr.rel target = $region3
  $region8: #{frame_wise_nn.1} parent=0 // loop_exit
    _

</llo_original>
